<compile_context>
chip_gen: v7x
topology: tpu7x:2x2x1
jax: 0.10.0
libtpu: 0.0.40
codegen_flags: <defaults>
</compile_context>

<pallas_src>
import functools

import jax
import jax.numpy as jnp
from jax.experimental import pallas as pl
from jax.experimental.pallas import tpu as pltpu


def _var_loss_kernel(mean_ref, logvar_ref, target_ref,
                     s0_ref, sv_ref, nv_ref,
                     acc0_ref, accv_ref, accn_ref,
                     *, d_group, num_rows, row_tile):
    """Packed layout: each 128-lane row holds 128 // d_group original samples.

    Accumulators (VMEM f32[8, 128], folded over sublanes, reduced once at finalize):
      acc0: sum over ALL samples of loss[:, 0]      (flag lane of each group)
      accv: sum over VALID samples of loss[:, 1:]   (non-flag lanes)
      accn: number of valid samples (Nv)
    `num_rows` is the number of packed rows holding real data; iterations/rows past it
    (grid overhang) are masked out.
    """
    i = pl.program_id(1)
    tiles_per_core = pl.num_programs(1)
    # Global (unclamped) tile index. The input index_map clamps to the last real tile,
    # so fully-out-of-range iterations just re-read it and are masked to zero below.
    g = pl.program_id(0) * tiles_per_core + i
    row_start = g * row_tile

    @pl.when(i == 0)
    def _init():
        acc0_ref[...] = jnp.zeros_like(acc0_ref)
        accv_ref[...] = jnp.zeros_like(accv_ref)
        accn_ref[...] = jnp.zeros_like(accn_ref)

    t = target_ref[...].astype(jnp.float32)
    m = mean_ref[...].astype(jnp.float32)
    lv = logvar_ref[...].astype(jnp.float32)
    tm, p = t.shape

    # Tiny (1, 128) flag-lane mask: a handful of vreg ops per step instead of a
    # (tile, 128)-sized iota/mod/compare rebuild.
    lane = jax.lax.broadcasted_iota(jnp.int32, (1, p), 1)
    is_flag = (lane & (d_group - 1)) == 0          # d_group is a power of two

    err = m - t
    loss = err * err * jnp.exp(-lv) + lv           # exp(-lv) on the EUP, no VPU divide

    def spread_groups(x):
        # Broadcast each group's flag-lane value across its d_group lanes with
        # log2(d_group) XLU roll+add steps (values never bleed across groups nor
        # wrap around the 128-lane ring, since the spread never exceeds d_group-1).
        s = 1
        while s < d_group:
            x = x + pltpu.roll(x, s, axis=1)
            s *= 2
        return x

    def fold(x):
        # (tm, p) -> (8, p) partial sums: pure vreg adds, no per-step XLU reduce.
        return jnp.sum(x.reshape(tm // 8, 8, p), axis=0)

    def accumulate(row_ok):
        flag_sel = jnp.logical_and(is_flag, t == 1.0)
        loss0 = jnp.where(is_flag, loss, 0.0)
        if row_ok is not None:                      # partial last tile only
            flag_sel = jnp.logical_and(flag_sel, row_ok)
            loss0 = jnp.where(row_ok, loss0, 0.0)
        flag01 = jnp.where(flag_sel, jnp.float32(1.0), jnp.float32(0.0))
        validf = spread_groups(flag01)              # 0/1 validity on every lane of the group
        lossv = (validf - flag01) * loss            # zero on flag lanes -> no extra select
        if row_ok is not None:
            lossv = jnp.where(row_ok, lossv, 0.0)   # overhang rows may hold garbage (inf/nan)
        acc0_ref[...] += fold(loss0)
        accv_ref[...] += fold(lossv)
        accn_ref[...] += fold(flag01)

    full_tile = row_start + row_tile <= num_rows

    @pl.when(full_tile)
    def _full():
        accumulate(None)

    @pl.when(jnp.logical_not(full_tile))
    def _tail():
        ridx = jax.lax.broadcasted_iota(jnp.int32, (tm, 1), 0)
        accumulate(ridx < num_rows - row_start)

    @pl.when(i == tiles_per_core - 1)
    def _finalize():
        s0_ref[...] = jnp.full(s0_ref.shape, jnp.sum(acc0_ref[...]), jnp.float32)
        sv_ref[...] = jnp.full(sv_ref.shape, jnp.sum(accv_ref[...]), jnp.float32)
        nv_ref[...] = jnp.full(nv_ref.shape, jnp.sum(accn_ref[...]), jnp.float32)


def _tpu_config():
    """(n_split TensorCores, packed-row tile cap, vmem_limit_bytes) per TPU generation."""
    kind = ""
    try:
        kind = jax.devices()[0].device_kind.lower()
    except Exception:
        pass
    if "v7" in kind or "tpu7" in kind:
        # 2 TensorCores/chip, 64 MiB VMEM per core: keep blocks at <= 2 MiB and split
        # the row loop across the two cores.
        return 2, 4096, 40 * 1024 * 1024
    if "v6" in kind or "v5e" in kind or "v5 lite" in kind or "v5lite" in kind:
        # Single TensorCore, 128 MiB VMEM: 4 MiB blocks amortize per-step overhead.
        return 1, 8192, 64 * 1024 * 1024
    # Unknown / older generation: conservative (still correct) defaults.
    return 1, 2048, None


def variational_loss_pallas(model_out, target_x, *, row_tile=None):
    """Forward pass of VariationalLoss.

    `row_tile` counts *packed* 128-lane rows (each packed row = 128 // D' samples).
    """
    mean, logvar, _skew = model_out
    n, d = target_x.shape
    assert d >= 2, "need a validity column plus at least one target column"
    assert d <= 128, "kernel packs a whole sample into one 128-lane group"

    dp = 1 << (d - 1).bit_length()     # feature dim padded to a power of two
    k = 128 // dp                      # samples per packed 128-lane row
    p = 128

    n_split, tile_cap, vmem_limit = _tpu_config()

    if d == dp and n % k == 0:
        # Common case: free row-major reshape; no padded copies, no extra HBM traffic.
        m0 = n // k
        pack = lambda x: x.reshape(m0, p)
    else:
        # Ragged case: minimal pad up to one whole packed row / power-of-two feature dim.
        # Zero padding contributes exactly 0 to every accumulator:
        #   loss = (0-0)^2 * exp(-0) + 0 = 0 and flag 0 != 1 (never counted valid).
        n_ceil = -(-n // k) * k
        m0 = n_ceil // k

        def pack(x):
            return jnp.pad(x, ((0, n_ceil - n), (0, dp - d))).reshape(m0, p)

    if row_tile is None:
        row_tile = tile_cap
    row_tile = min(row_tile, -(-m0 // 8) * 8)
    row_tile = max(8, (row_tile // 8) * 8)

    total_tiles = -(-m0 // row_tile)
    n_split = max(1, min(n_split, total_tiles))
    tiles_per_core = -(-total_tiles // n_split)
    last_tile = total_tiles - 1

    mean_p, logvar_p, target_p = pack(mean), pack(logvar), pack(target_x)

    kernel = functools.partial(_var_loss_kernel, d_group=dp,
                               num_rows=m0, row_tile=row_tile)

    # The packed arrays are never padded up to a grid multiple; the last (partial) tile
    # and any fully-out-of-range iterations are masked in-kernel. The clamp below is only
    # needed when the 2-way core split does not divide the tile count evenly.
    if n_split * tiles_per_core > total_tiles:
        in_idx = lambda c, i: (jnp.minimum(c * tiles_per_core + i, last_tile), 0)
    else:
        in_idx = lambda c, i: (c * tiles_per_core + i, 0)

    in_spec = pl.BlockSpec((row_tile, p), in_idx)
    # TODO(synk): if profiling shows exposed DMA at small tiles, add
    # pipeline_mode=pl.Buffered(3) to the input specs.
    out_spec = pl.BlockSpec((1, 1, 1), lambda c, i: (c, 0, 0))
    part = jax.ShapeDtypeStruct((n_split, 1, 1), jnp.float32)

    cp_kwargs = dict(dimension_semantics=("parallel", "arbitrary"))
    if vmem_limit is not None:
        cp_kwargs["vmem_limit_bytes"] = vmem_limit

    s0, sv, nv = pl.pallas_call(
        kernel,
        out_shape=(part, part, part),
        grid_spec=pltpu.PrefetchScalarGridSpec(
            num_scalar_prefetch=0,
            grid=(n_split, tiles_per_core),
            in_specs=[in_spec, in_spec, in_spec],
            out_specs=(out_spec, out_spec, out_spec),
            scratch_shapes=[
                pltpu.VMEM((8, p), jnp.float32),
                pltpu.VMEM((8, p), jnp.float32),
                pltpu.VMEM((8, p), jnp.float32),
            ],
        ),
        compiler_params=pltpu.CompilerParams(**cp_kwargs),
    )(mean_p, logvar_p, target_p)

    s0 = jnp.sum(s0)
    sv = jnp.sum(sv)
    nv = jnp.sum(nv)   # NOTE: nv == 0 (no valid rows) -> NaN, same as the reference
    return s0 / jnp.float32(n) + sv / nv


class VariationalLoss:
    """JAX/Pallas port of the PyTorch VariationalLoss module (forward only)."""

    def __init__(self, labels, use_skew=False):
        self.labels = labels
        self.metrics = {}   # TODO(synk): host-side get_metrics() .item() dict not reproduced

    def __call__(self, model_out, target_x):
        return variational_loss_pallas(model_out, target_x)


def _reference_loss(model_out, target_x):
    mean, logvar, _skew = model_out
    err = mean - target_x
    loss = err * err / jnp.exp(logvar) + logvar
    valid = target_x[:, 0] == 1.0
    nv = jnp.sum(valid.astype(jnp.float32))
    other = jnp.sum(jnp.where(valid[:, None], loss[:, 1:], 0.0)) / nv
    return jnp.mean(loss[:, 0]) + other


def _make_inputs(key, n, d):
    k1, k2, k3, k4 = jax.random.split(key, 4)
    mean = jax.random.normal(k1, (n, d), dtype=jnp.float32)
    logvar = 0.5 * jax.random.normal(k2, (n, d), dtype=jnp.float32)
    skew = jnp.zeros((n, d), dtype=jnp.float32)  # unused, interface parity
    # target_x: column 0 is the validity flag (exactly 1.0 for valid rows)
    valid_flag = (jax.random.uniform(k3, (n, 1)) > 0.4).astype(jnp.float32)
    valid_flag = valid_flag.at[0, 0].set(1.0)    # guarantee at least one valid row
    rest = jax.random.normal(k4, (n, d - 1), dtype=jnp.float32)
    target_x = jnp.concatenate([valid_flag, rest], axis=1)
    return (mean, logvar, skew), target_x


if __name__ == "__main__":
    keys = jax.random.split(jax.random.PRNGKey(0), 3)

    # Case 1 (module-typical shapes): D a power of two, N a multiple of the packing
    # factor -> zero-copy fast path.
    model_out, target_x = _make_inputs(keys[0], 16, 8)
    loss_mod = VariationalLoss([f"label_{i}" for i in range(8)])
    out = jax.block_until_ready(loss_mod(model_out, target_x))
    ref = _reference_loss(model_out, target_x)
    assert jnp.allclose(out, ref, rtol=1e-5, atol=1e-5), (out, ref)

    # Case 2: ragged shapes (D not a power of two, N not a multiple of the packing
    # factor) -> minimal-pad fallback + in-kernel tail masking.
    model_out, target_x = _make_inputs(keys[1], 13, 6)
    out = jax.block_until_ready(variational_loss_pallas(model_out, target_x))
    ref = _reference_loss(model_out, target_x)
    assert jnp.allclose(out, ref, rtol=1e-5, atol=1e-5), (out, ref)

    # Case 3: multi-tile accumulation with a partial last tile (force a tiny row_tile).
    model_out, target_x = _make_inputs(keys[2], 300, 8)
    out = jax.block_until_ready(
        variational_loss_pallas(model_out, target_x, row_tile=8))
    ref = _reference_loss(model_out, target_x)
    assert jnp.allclose(out, ref, rtol=1e-5, atol=1e-5), (out, ref)

    print("KERNEL_OK")
</pallas_src>

<mosaic_0001>
module attributes {stable_mosaic.version = 11 : i64} {
  func.func @_var_loss_kernel(%arg0: i32, %arg1: i32, %arg2: memref<8x128xf32, #tpu.memory_space<vmem>>, %arg3: memref<8x128xf32, #tpu.memory_space<vmem>>, %arg4: memref<8x128xf32, #tpu.memory_space<vmem>>, %arg5: memref<1x1x1xf32, #tpu.memory_space<vmem>>, %arg6: memref<1x1x1xf32, #tpu.memory_space<vmem>>, %arg7: memref<1x1x1xf32, #tpu.memory_space<vmem>>, %arg8: memref<8x128xf32, #tpu.memory_space<vmem>>, %arg9: memref<8x128xf32, #tpu.memory_space<vmem>>, %arg10: memref<8x128xf32, #tpu.memory_space<vmem>>) attributes {dimension_semantics = [#tpu.dimension_semantics<parallel>, #tpu.dimension_semantics<arbitrary>], iteration_bounds = array<i64: 1, 1>, scalar_prefetch = 0 : i64, scratch_operands = 3 : i64, tpu.core_type = #tpu.core_type<tc>, window_params = [{transform_indices = @transform_0, window_bounds = array<i64: 8, 128>}, {transform_indices = @transform_1, window_bounds = array<i64: 8, 128>}, {transform_indices = @transform_2, window_bounds = array<i64: 8, 128>}, {transform_indices = @transform_3, window_bounds = array<i64: 1, 1, 1>}, {transform_indices = @transform_4, window_bounds = array<i64: 1, 1, 1>}, {transform_indices = @transform_5, window_bounds = array<i64: 1, 1, 1>}]} {
    %c1_i32 = arith.constant 1 : i32
    %0 = arith.muli %arg0, %c1_i32 : i32
    %1 = arith.addi %0, %arg1 : i32
    %c8_i32 = arith.constant 8 : i32
    %2 = arith.muli %1, %c8_i32 : i32
    %c0_i32 = arith.constant 0 : i32
    %3 = arith.cmpi eq, %arg1, %c0_i32 : i32
    %4 = arith.extui %3 : i1 to i32
    %c0_i32_0 = arith.constant 0 : i32
    %5 = arith.cmpi ne, %4, %c0_i32_0 : i32
    scf.if %5 {
      %cst_13 = arith.constant 0.000000e+00 : f32
      %31 = vector.broadcast %cst_13 : f32 to vector<8x128xf32>
      %c0_14 = arith.constant 0 : index
      %c0_15 = arith.constant 0 : index
      %32 = vector.load %arg8[%c0_14, %c0_15] : memref<8x128xf32, #tpu.memory_space<vmem>>, vector<8x128xf32>
      tpu.vector_store %arg8[%c0_14, %c0_15], %31 {strides = array<i32>} : memref<8x128xf32, #tpu.memory_space<vmem>>, vector<8x128xf32>,
      %cst_16 = arith.constant 0.000000e+00 : f32
      %33 = vector.broadcast %cst_16 : f32 to vector<8x128xf32>
      %c0_17 = arith.constant 0 : index
      %c0_18 = arith.constant 0 : index
      %34 = vector.load %arg9[%c0_17, %c0_18] : memref<8x128xf32, #tpu.memory_space<vmem>>, vector<8x128xf32>
      tpu.vector_store %arg9[%c0_17, %c0_18], %33 {strides = array<i32>} : memref<8x128xf32, #tpu.memory_space<vmem>>, vector<8x128xf32>,
      %cst_19 = arith.constant 0.000000e+00 : f32
      %35 = vector.broadcast %cst_19 : f32 to vector<8x128xf32>
      %c0_20 = arith.constant 0 : index
      %c0_21 = arith.constant 0 : index
      %36 = vector.load %arg10[%c0_20, %c0_21] : memref<8x128xf32, #tpu.memory_space<vmem>>, vector<8x128xf32>
      tpu.vector_store %arg10[%c0_20, %c0_21], %35 {strides = array<i32>} : memref<8x128xf32, #tpu.memory_space<vmem>>, vector<8x128xf32>,
    } else {
    }
    %c0 = arith.constant 0 : index
    %c0_1 = arith.constant 0 : index
    %6 = vector.load %arg4[%c0, %c0_1] : memref<8x128xf32, #tpu.memory_space<vmem>>, vector<8x128xf32>
    %c0_2 = arith.constant 0 : index
    %c0_3 = arith.constant 0 : index
    %7 = vector.load %arg2[%c0_2, %c0_3] : memref<8x128xf32, #tpu.memory_space<vmem>>, vector<8x128xf32>
    %c0_4 = arith.constant 0 : index
    %c0_5 = arith.constant 0 : index
    %8 = vector.load %arg3[%c0_4, %c0_5] : memref<8x128xf32, #tpu.memory_space<vmem>>, vector<8x128xf32>
    %9 = tpu.iota {dimensions = array<i32: 1>} : vector<1x128xi32>
    %c7_i32 = arith.constant 7 : i32
    %10 = vector.broadcast %c7_i32 : i32 to vector<1x128xi32>
    %11 = arith.andi %9, %10 : vector<1x128xi32>
    %c0_i32_6 = arith.constant 0 : i32
    %12 = vector.broadcast %c0_i32_6 : i32 to vector<1x128xi32>
    %13 = arith.cmpi eq, %11, %12 : vector<1x128xi32>
    %14 = arith.subf %7, %6 : vector<8x128xf32>
    %15 = arith.mulf %14, %14 : vector<8x128xf32>
    %cst = arith.constant 0.000000e+00 : f32
    %16 = vector.broadcast %cst : f32 to vector<8x128xf32>
    %17 = arith.subf %16, %8 : vector<8x128xf32>
    %18 = math.exp %17 : vector<8x128xf32>
    %19 = arith.mulf %15, %18 : vector<8x128xf32>
    %20 = arith.addf %19, %8 : vector<8x128xf32>
    %c8_i32_7 = arith.constant 8 : i32
    %21 = arith.addi %2, %c8_i32_7 : i32
    %c1_i32_8 = arith.constant 1 : i32
    %22 = arith.cmpi sle, %21, %c1_i32_8 : i32
    %23 = arith.extui %22 : i1 to i32
    %c0_i32_9 = arith.constant 0 : i32
    %24 = arith.cmpi ne, %23, %c0_i32_9 : i32
    scf.if %24 {
      %cst_13 = arith.constant 1.000000e+00 : f32
      %31 = vector.broadcast %cst_13 : f32 to vector<8x128xf32>
      %32 = arith.cmpf oeq, %6, %31 : vector<8x128xf32>
      %33 = vector.broadcast %13 : vector<1x128xi1> to vector<8x128xi1>
      %34 = arith.andi %33, %32 : vector<8x128xi1>
      %cst_14 = arith.constant 0.000000e+00 : f32
      %35 = vector.shape_cast %13 : vector<1x128xi1> to vector<1x128xi1>
      %36 = vector.broadcast %35 : vector<1x128xi1> to vector<8x128xi1>
      %37 = vector.broadcast %cst_14 : f32 to vector<8x128xf32>
      %38 = arith.select %36, %20, %37 : vector<8x128xi1>, vector<8x128xf32>
      %cst_15 = arith.constant 1.000000e+00 : f32
      %cst_16 = arith.constant 0.000000e+00 : f32
      %39 = vector.broadcast %cst_15 : f32 to vector<8x128xf32>
      %40 = vector.broadcast %cst_16 : f32 to vector<8x128xf32>
      %41 = arith.select %34, %39, %40 : vector<8x128xi1>, vector<8x128xf32>
      %c1_i32_17 = arith.constant 1 : i32
      %42 = tpu.dynamic_rotate %41 by %c1_i32_17 dim 1 : vector<8x128xf32>, i32 -> vector<8x128xf32>
      %43 = arith.addf %41, %42 : vector<8x128xf32>
      %c2_i32 = arith.constant 2 : i32
      %44 = tpu.dynamic_rotate %43 by %c2_i32 dim 1 : vector<8x128xf32>, i32 -> vector<8x128xf32>
      %45 = arith.addf %43, %44 : vector<8x128xf32>
      %c4_i32 = arith.constant 4 : i32
      %46 = tpu.dynamic_rotate %45 by %c4_i32 dim 1 : vector<8x128xf32>, i32 -> vector<8x128xf32>
      %47 = arith.addf %45, %46 : vector<8x128xf32>
      %48 = arith.subf %47, %41 : vector<8x128xf32>
      %49 = arith.mulf %48, %20 : vector<8x128xf32>
      %c0_18 = arith.constant 0 : index
      %c0_19 = arith.constant 0 : index
      %50 = vector.load %arg8[%c0_18, %c0_19] : memref<8x128xf32, #tpu.memory_space<vmem>>, vector<8x128xf32>
      %51 = vector.shape_cast %38 : vector<8x128xf32> to vector<1x8x128xf32>
      %cst_20 = arith.constant dense<0.000000e+00> : vector<8x128xf32>
      %52 = vector.multi_reduction <add>, %51, %cst_20 [0] : vector<1x8x128xf32> to vector<8x128xf32>
      %53 = arith.addf %50, %52 : vector<8x128xf32>
      %c0_21 = arith.constant 0 : index
      %c0_22 = arith.constant 0 : index
      %54 = vector.load %arg8[%c0_21, %c0_22] : memref<8x128xf32, #tpu.memory_space<vmem>>, vector<8x128xf32>
      tpu.vector_store %arg8[%c0_21, %c0_22], %53 {strides = array<i32>} : memref<8x128xf32, #tpu.memory_space<vmem>>, vector<8x128xf32>,
      %c0_23 = arith.constant 0 : index
      %c0_24 = arith.constant 0 : index
      %55 = vector.load %arg9[%c0_23, %c0_24] : memref<8x128xf32, #tpu.memory_space<vmem>>, vector<8x128xf32>
      %56 = vector.shape_cast %49 : vector<8x128xf32> to vector<1x8x128xf32>
      %cst_25 = arith.constant dense<0.000000e+00> : vector<8x128xf32>
      %57 = vector.multi_reduction <add>, %56, %cst_25 [0] : vector<1x8x128xf32> to vector<8x128xf32>
      %58 = arith.addf %55, %57 : vector<8x128xf32>
      %c0_26 = arith.constant 0 : index
      %c0_27 = arith.constant 0 : index
      %59 = vector.load %arg9[%c0_26, %c0_27] : memref<8x128xf32, #tpu.memory_space<vmem>>, vector<8x128xf32>
      tpu.vector_store %arg9[%c0_26, %c0_27], %58 {strides = array<i32>} : memref<8x128xf32, #tpu.memory_space<vmem>>, vector<8x128xf32>,
      %c0_28 = arith.constant 0 : index
      %c0_29 = arith.constant 0 : index
      %60 = vector.load %arg10[%c0_28, %c0_29] : memref<8x128xf32, #tpu.memory_space<vmem>>, vector<8x128xf32>
      %61 = vector.shape_cast %41 : vector<8x128xf32> to vector<1x8x128xf32>
      %cst_30 = arith.constant dense<0.000000e+00> : vector<8x128xf32>
      %62 = vector.multi_reduction <add>, %61, %cst_30 [0] : vector<1x8x128xf32> to vector<8x128xf32>
      %63 = arith.addf %60, %62 : vector<8x128xf32>
      %c0_31 = arith.constant 0 : index
      %c0_32 = arith.constant 0 : index
      %64 = vector.load %arg10[%c0_31, %c0_32] : memref<8x128xf32, #tpu.memory_space<vmem>>, vector<8x128xf32>
      tpu.vector_store %arg10[%c0_31, %c0_32], %63 {strides = array<i32>} : memref<8x128xf32, #tpu.memory_space<vmem>>, vector<8x128xf32>,
    } else {
    }
    %true = arith.constant true
    %25 = arith.xori %22, %true : i1
    %26 = arith.extui %25 : i1 to i32
    %c0_i32_10 = arith.constant 0 : i32
    %27 = arith.cmpi ne, %26, %c0_i32_10 : i32
    scf.if %27 {
      %31 = tpu.iota {dimensions = array<i32: 0>} : vector<8x1xi32>
      %c1_i32_13 = arith.constant 1 : i32
      %32 = arith.subi %c1_i32_13, %2 : i32
      %33 = vector.broadcast %32 : i32 to vector<8x1xi32>
      %34 = arith.cmpi slt, %31, %33 : vector<8x1xi32>
      %cst_14 = arith.constant 1.000000e+00 : f32
      %35 = vector.broadcast %cst_14 : f32 to vector<8x128xf32>
      %36 = arith.cmpf oeq, %6, %35 : vector<8x128xf32>
      %37 = vector.broadcast %13 : vector<1x128xi1> to vector<8x128xi1>
      %38 = arith.andi %37, %36 : vector<8x128xi1>
      %cst_15 = arith.constant 0.000000e+00 : f32
      %39 = vector.shape_cast %13 : vector<1x128xi1> to vector<1x128xi1>
      %40 = vector.broadcast %39 : vector<1x128xi1> to vector<8x128xi1>
      %41 = vector.broadcast %cst_15 : f32 to vector<8x128xf32>
      %42 = arith.select %40, %20, %41 : vector<8x128xi1>, vector<8x128xf32>
      %43 = vector.broadcast %34 : vector<8x1xi1> to vector<8x128xi1>
      %44 = arith.andi %38, %43 : vector<8x128xi1>
      %cst_16 = arith.constant 0.000000e+00 : f32
      %45 = vector.shape_cast %34 : vector<8x1xi1> to vector<8x1xi1>
      %46 = vector.broadcast %45 : vector<8x1xi1> to vector<8x128xi1>
      %47 = vector.broadcast %cst_16 : f32 to vector<8x128xf32>
      %48 = arith.select %46, %42, %47 : vector<8x128xi1>, vector<8x128xf32>
      %cst_17 = arith.constant 1.000000e+00 : f32
      %cst_18 = arith.constant 0.000000e+00 : f32
      %49 = vector.broadcast %cst_17 : f32 to vector<8x128xf32>
      %50 = vector.broadcast %cst_18 : f32 to vector<8x128xf32>
      %51 = arith.select %44, %49, %50 : vector<8x128xi1>, vector<8x128xf32>
      %c1_i32_19 = arith.constant 1 : i32
      %52 = tpu.dynamic_rotate %51 by %c1_i32_19 dim 1 : vector<8x128xf32>, i32 -> vector<8x128xf32>
      %53 = arith.addf %51, %52 : vector<8x128xf32>
      %c2_i32 = arith.constant 2 : i32
      %54 = tpu.dynamic_rotate %53 by %c2_i32 dim 1 : vector<8x128xf32>, i32 -> vector<8x128xf32>
      %55 = arith.addf %53, %54 : vector<8x128xf32>
      %c4_i32 = arith.constant 4 : i32
      %56 = tpu.dynamic_rotate %55 by %c4_i32 dim 1 : vector<8x128xf32>, i32 -> vector<8x128xf32>
      %57 = arith.addf %55, %56 : vector<8x128xf32>
      %58 = arith.subf %57, %51 : vector<8x128xf32>
      %59 = arith.mulf %58, %20 : vector<8x128xf32>
      %cst_20 = arith.constant 0.000000e+00 : f32
      %60 = vector.shape_cast %34 : vector<8x1xi1> to vector<8x1xi1>
      %61 = vector.broadcast %60 : vector<8x1xi1> to vector<8x128xi1>
      %62 = vector.broadcast %cst_20 : f32 to vector<8x128xf32>
      %63 = arith.select %61, %59, %62 : vector<8x128xi1>, vector<8x128xf32>
      %c0_21 = arith.constant 0 : index
      %c0_22 = arith.constant 0 : index
      %64 = vector.load %arg8[%c0_21, %c0_22] : memref<8x128xf32, #tpu.memory_space<vmem>>, vector<8x128xf32>
      %65 = vector.shape_cast %48 : vector<8x128xf32> to vector<1x8x128xf32>
      %cst_23 = arith.constant dense<0.000000e+00> : vector<8x128xf32>
      %66 = vector.multi_reduction <add>, %65, %cst_23 [0] : vector<1x8x128xf32> to vector<8x128xf32>
      %67 = arith.addf %64, %66 : vector<8x128xf32>
      %c0_24 = arith.constant 0 : index
      %c0_25 = arith.constant 0 : index
      %68 = vector.load %arg8[%c0_24, %c0_25] : memref<8x128xf32, #tpu.memory_space<vmem>>, vector<8x128xf32>
      tpu.vector_store %arg8[%c0_24, %c0_25], %67 {strides = array<i32>} : memref<8x128xf32, #tpu.memory_space<vmem>>, vector<8x128xf32>,
      %c0_26 = arith.constant 0 : index
      %c0_27 = arith.constant 0 : index
      %69 = vector.load %arg9[%c0_26, %c0_27] : memref<8x128xf32, #tpu.memory_space<vmem>>, vector<8x128xf32>
      %70 = vector.shape_cast %63 : vector<8x128xf32> to vector<1x8x128xf32>
      %cst_28 = arith.constant dense<0.000000e+00> : vector<8x128xf32>
      %71 = vector.multi_reduction <add>, %70, %cst_28 [0] : vector<1x8x128xf32> to vector<8x128xf32>
      %72 = arith.addf %69, %71 : vector<8x128xf32>
      %c0_29 = arith.constant 0 : index
      %c0_30 = arith.constant 0 : index
      %73 = vector.load %arg9[%c0_29, %c0_30] : memref<8x128xf32, #tpu.memory_space<vmem>>, vector<8x128xf32>
      tpu.vector_store %arg9[%c0_29, %c0_30], %72 {strides = array<i32>} : memref<8x128xf32, #tpu.memory_space<vmem>>, vector<8x128xf32>,
      %c0_31 = arith.constant 0 : index
      %c0_32 = arith.constant 0 : index
      %74 = vector.load %arg10[%c0_31, %c0_32] : memref<8x128xf32, #tpu.memory_space<vmem>>, vector<8x128xf32>
      %75 = vector.shape_cast %51 : vector<8x128xf32> to vector<1x8x128xf32>
      %cst_33 = arith.constant dense<0.000000e+00> : vector<8x128xf32>
      %76 = vector.multi_reduction <add>, %75, %cst_33 [0] : vector<1x8x128xf32> to vector<8x128xf32>
      %77 = arith.addf %74, %76 : vector<8x128xf32>
      %c0_34 = arith.constant 0 : index
      %c0_35 = arith.constant 0 : index
      %78 = vector.load %arg10[%c0_34, %c0_35] : memref<8x128xf32, #tpu.memory_space<vmem>>, vector<8x128xf32>
      tpu.vector_store %arg10[%c0_34, %c0_35], %77 {strides = array<i32>} : memref<8x128xf32, #tpu.memory_space<vmem>>, vector<8x128xf32>,
    } else {
    }
    %c0_i32_11 = arith.constant 0 : i32
    %28 = arith.cmpi eq, %arg1, %c0_i32_11 : i32
    %29 = arith.extui %28 : i1 to i32
    %c0_i32_12 = arith.constant 0 : i32
    %30 = arith.cmpi ne, %29, %c0_i32_12 : i32
    scf.if %30 {
      %c0_13 = arith.constant 0 : index
      %c0_14 = arith.constant 0 : index
      %31 = vector.load %arg8[%c0_13, %c0_14] : memref<8x128xf32, #tpu.memory_space<vmem>>, vector<8x128xf32>
      %32 = vector.shape_cast %31 : vector<8x128xf32> to vector<1x8x128xf32>
      %cst_15 = arith.constant dense<0.000000e+00> : vector<1xf32>
      %33 = vector.multi_reduction <add>, %32, %cst_15 [1, 2] : vector<1x8x128xf32> to vector<1xf32>
      %34 = vector.shape_cast %33 : vector<1xf32> to vector<1x1x1xf32>
      %35 = vector.extract %34[0, 0, 0] : f32 from vector<1x1x1xf32>
      %36 = vector.broadcast %35 : f32 to vector<1x1x1xf32>
      %c0_16 = arith.constant 0 : index
      %c0_17 = arith.constant 0 : index
      %c0_18 = arith.constant 0 : index
      %37 = vector.load %arg5[%c0_16, %c0_17, %c0_18] : memref<1x1x1xf32, #tpu.memory_space<vmem>>, vector<1x1x1xf32>
      tpu.vector_store %arg5[%c0_16, %c0_17, %c0_18], %36 {strides = array<i32>} : memref<1x1x1xf32, #tpu.memory_space<vmem>>, vector<1x1x1xf32>,
      %c0_19 = arith.constant 0 : index
      %c0_20 = arith.constant 0 : index
      %38 = vector.load %arg9[%c0_19, %c0_20] : memref<8x128xf32, #tpu.memory_space<vmem>>, vector<8x128xf32>
      %39 = vector.shape_cast %38 : vector<8x128xf32> to vector<1x8x128xf32>
      %cst_21 = arith.constant dense<0.000000e+00> : vector<1xf32>
      %40 = vector.multi_reduction <add>, %39, %cst_21 [1, 2] : vector<1x8x128xf32> to vector<1xf32>
      %41 = vector.shape_cast %40 : vector<1xf32> to vector<1x1x1xf32>
      %42 = vector.extract %41[0, 0, 0] : f32 from vector<1x1x1xf32>
      %43 = vector.broadcast %42 : f32 to vector<1x1x1xf32>
      %c0_22 = arith.constant 0 : index
      %c0_23 = arith.constant 0 : index
      %c0_24 = arith.constant 0 : index
      %44 = vector.load %arg6[%c0_22, %c0_23, %c0_24] : memref<1x1x1xf32, #tpu.memory_space<vmem>>, vector<1x1x1xf32>
      tpu.vector_store %arg6[%c0_22, %c0_23, %c0_24], %43 {strides = array<i32>} : memref<1x1x1xf32, #tpu.memory_space<vmem>>, vector<1x1x1xf32>,
      %c0_25 = arith.constant 0 : index
      %c0_26 = arith.constant 0 : index
      %45 = vector.load %arg10[%c0_25, %c0_26] : memref<8x128xf32, #tpu.memory_space<vmem>>, vector<8x128xf32>
      %46 = vector.shape_cast %45 : vector<8x128xf32> to vector<1x8x128xf32>
      %cst_27 = arith.constant dense<0.000000e+00> : vector<1xf32>
      %47 = vector.multi_reduction <add>, %46, %cst_27 [1, 2] : vector<1x8x128xf32> to vector<1xf32>
      %48 = vector.shape_cast %47 : vector<1xf32> to vector<1x1x1xf32>
      %49 = vector.extract %48[0, 0, 0] : f32 from vector<1x1x1xf32>
      %50 = vector.broadcast %49 : f32 to vector<1x1x1xf32>
      %c0_28 = arith.constant 0 : index
      %c0_29 = arith.constant 0 : index
      %c0_30 = arith.constant 0 : index
      %51 = vector.load %arg7[%c0_28, %c0_29, %c0_30] : memref<1x1x1xf32, #tpu.memory_space<vmem>>, vector<1x1x1xf32>
      tpu.vector_store %arg7[%c0_28, %c0_29, %c0_30], %50 {strides = array<i32>} : memref<1x1x1xf32, #tpu.memory_space<vmem>>, vector<1x1x1xf32>,
    } else {
    }
    return
  }
  func.func @transform_0(%arg0: i32, %arg1: i32) -> (i32, i32) {
    %c1_i32 = arith.constant 1 : i32
    %0 = arith.muli %arg0, %c1_i32 : i32
    %1 = arith.addi %0, %arg1 : i32
    %c0_i32 = arith.constant 0 : i32
    %c0_i32_0 = arith.constant 0 : i32
    return %1, %c0_i32 : i32, i32
  }
  func.func @transform_1(%arg0: i32, %arg1: i32) -> (i32, i32) {
    %c1_i32 = arith.constant 1 : i32
    %0 = arith.muli %arg0, %c1_i32 : i32
    %1 = arith.addi %0, %arg1 : i32
    %c0_i32 = arith.constant 0 : i32
    %c0_i32_0 = arith.constant 0 : i32
    return %1, %c0_i32 : i32, i32
  }
  func.func @transform_2(%arg0: i32, %arg1: i32) -> (i32, i32) {
    %c1_i32 = arith.constant 1 : i32
    %0 = arith.muli %arg0, %c1_i32 : i32
    %1 = arith.addi %0, %arg1 : i32
    %c0_i32 = arith.constant 0 : i32
    %c0_i32_0 = arith.constant 0 : i32
    return %1, %c0_i32 : i32, i32
  }
  func.func @transform_3(%arg0: i32, %arg1: i32) -> (i32, i32, i32) {
    %c0_i32 = arith.constant 0 : i32
    %c0_i32_0 = arith.constant 0 : i32
    %c0_i32_1 = arith.constant 0 : i32
    return %arg0, %c0_i32, %c0_i32_0 : i32, i32, i32
  }
  func.func @transform_4(%arg0: i32, %arg1: i32) -> (i32, i32, i32) {
    %c0_i32 = arith.constant 0 : i32
    %c0_i32_0 = arith.constant 0 : i32
    %c0_i32_1 = arith.constant 0 : i32
    return %arg0, %c0_i32, %c0_i32_0 : i32, i32, i32
  }
  func.func @transform_5(%arg0: i32, %arg1: i32) -> (i32, i32, i32) {
    %c0_i32 = arith.constant 0 : i32
    %c0_i32_0 = arith.constant 0 : i32
    %c0_i32_1 = arith.constant 0 : i32
    return %arg0, %c0_i32, %c0_i32_0 : i32, i32, i32
  }
}

</mosaic_0001>

<llo_original>
// kernel: tpu_custom_call.1
$region0: #{tpu_custom_call.1}
  #allocation0 [shape = 'u32[]', space=smem, size = 0x4, offset = 0x4, fixed_abs, tag = 'smem constant byte address 0x4 - core index']
  #allocation1 [shape = 'u32[144,128]{1,0:T(1,128)}', space=vmem, size = 0x12000, scoped, tag = 'internal scratch']
  #allocation2 [shape = 'f32[8,128]{1,0:T(8,128)}', space=vmem, size = 0x1000, scoped, tag = 'scratch operand']
  #allocation3 [shape = 'f32[8,128]{1,0:T(8,128)}', space=vmem, size = 0x1000, scoped, tag = 'scratch operand']
  #allocation4 [shape = 'f32[8,128]{1,0:T(8,128)}', space=vmem, size = 0x1000, scoped, tag = 'scratch operand']
  %s0 = inlined_call_operand.hbm [shape: f32[1,128], index: 0, kind: input, shape index: {}]
  %s1 = inlined_call_operand.vmem [shape: f32[1,128], index: 1, kind: input, shape index: {}]
  %s2 = inlined_call_operand.vmem [shape: f32[1,128], index: 2, kind: input, shape index: {}]
  %s3 = inlined_call_operand.hbm [shape: f32[1,1,1], index: 3, kind: output, shape index: {0}]
  %s4 = inlined_call_operand.hbm [shape: f32[1,1,1], index: 4, kind: output, shape index: {1}]
  %s5 = inlined_call_operand.hbm [shape: f32[1,1,1], index: 5, kind: output, shape index: {2}]
  %6 = xla_tuple %s3, %s4, %s5
  %s7 = sld [smem:[#allocation0]]
  $region58: #{tpu_custom_call.1} parent=0
    _
  %s9 = ssub.s32 1, %s7
  %s10 = scalar_select 0, %s9, %s7
  $region1: #{tpu_custom_call.1} parent=0
    #allocation5 [shape = 'u8[4096]{0}', space=vmem, size = 0x1000, scoped, tag = 'input window, operand 0, single buffered']
    #allocation6 [shape = 's32[1]{0}', space=sflag, size = 0x4, scoped, tag = 'scoped memory for tpu_custom_call.1']
    #allocation7 [shape = 's32[1]{0}', space=sflag, size = 0x4, scoped, tag = 'scoped memory for tpu_custom_call.1']
    #allocation8 [shape = 'u8[512]{0}', space=vmem, size = 0x400, scoped, tag = 'output window, operand 0, single buffered']
    #allocation9 [shape = 'u8[512]{0}', space=vmem, size = 0x400, scoped, tag = 'output window, operand 1, single buffered']
    #allocation10 [shape = 's32[1]{0}', space=sflag, size = 0x4, scoped, tag = 'scoped memory for tpu_custom_call.1']
    #allocation11 [shape = 'u8[512]{0}', space=vmem, size = 0x400, scoped, tag = 'output window, operand 2, single buffered']
    %11 = vsyncpa [#allocation6], 0
    %12 = vsyncpa [#allocation7], 0
    %13 = vsyncpa [#allocation10], 0
    // Predicated region
    $region2: #{tpu_custom_call.1} parent=1 // pred_check
      _
    $region3: #{tpu_custom_call.1} parent=1 // pred_check_branch
      %15 = sbr.rel (0) target = $region5
    $region4: #{tpu_custom_call.1} parent=1 // pred_region
      %s16 = sadd.s32 0, 0
      %s17 = smul.u32 8, %s16
      %s18 = ssub.s32 1, %s17
      %s19 = smul.u32 16, %s18
      %s21 = ssub.s32 128, %s19
      %22 = vsyncadd [#allocation6], %s21
      %p23 = scmp.ne.s32.totalorder 0, %s19
      %s24 = smul.addr %s17, 16
      %s25 = scalar_lea.hbm %s0, %s24
      %s26 = sshll.u32 [#allocation5], 4
      %s27 = int_to_ptr.vmem [resolvable:$true] %s26
      %s28 = sshll.u32 %s18, 4
      %32 = dma.hbm_to_vmem [thread:$0]  (%p23), %s25, %s28, %s27, [#allocation6], 16, 16, 1
    $region5: #{tpu_custom_call.1} parent=1 // pred_fallthru
      _
    // Predicated region
    $region6: #{tpu_custom_call.1} parent=1 // pred_check
      _
    $region7: #{tpu_custom_call.1} parent=1 // pred_check_branch
      %34 = sbr.rel (0) target = $region9
    $region8: #{tpu_custom_call.1} parent=1 // pred_region
      %s35 = sadd.s32 0, 0
      %s36 = smul.u32 8, %s35
      %s37 = ssub.s32 1, %s36
      %s38 = smul.u32 16, %s37
      %p39 = scmp.lt.s32.totalorder %s36, 0
      %s40 = scalar_select %p39, %s36, 0
      %s41 = scalar_lea.vmem %s1, %s40
      %s42 = sadd.s32 0, 0
      %s43 = smul.u32 8, %s42
      %s44 = ssub.s32 1, %s43
      %s45 = smul.u32 16, %s44
    $region9: #{tpu_custom_call.1} parent=1 // pred_fallthru
      _
    // Predicated region
    $region10: #{tpu_custom_call.1} parent=1 // pred_check
      _
    $region11: #{tpu_custom_call.1} parent=1 // pred_check_branch
      %47 = sbr.rel (0) target = $region13
    $region12: #{tpu_custom_call.1} parent=1 // pred_region
      %s48 = sadd.s32 0, 0
      %s49 = smul.u32 8, %s48
      %s50 = ssub.s32 1, %s49
      %s51 = smul.u32 16, %s50
      %p52 = scmp.lt.s32.totalorder %s49, 0
      %s53 = scalar_select %p52, %s49, 0
      %s54 = scalar_lea.vmem %s2, %s53
      %s55 = sadd.s32 0, 0
      %s56 = smul.u32 8, %s55
      %s57 = ssub.s32 1, %s56
      %s58 = smul.u32 16, %s57
    $region13: #{tpu_custom_call.1} parent=1 // pred_fallthru
      _
    // Predicated region
    $region14: #{tpu_custom_call.1} parent=1 // pred_check
      _
    $region15: #{tpu_custom_call.1} parent=1 // pred_check_branch
      %60 = sbr.rel (0) target = $region17
    $region16: #{tpu_custom_call.1} parent=1 // pred_region
      %61 = dma.done [#allocation6], 128
    $region17: #{tpu_custom_call.1} parent=1 // pred_fallthru
      _
    %s62 = sadd.s32 0, 0
    %s63 = smul.u32 8, %s62
    %s64 = ssub.s32 1, %s63
    %s65 = smul.u32 16, %s64
    %p66 = scmp.lt.s32.totalorder %s63, 0
    %s67 = scalar_select %p66, %s63, 0
    %s68 = scalar_lea.vmem %s1, %s67
    %s69 = sadd.s32 0, 0
    %s70 = smul.u32 8, %s69
    %s71 = ssub.s32 1, %s70
    %s72 = smul.u32 16, %s71
    %p73 = scmp.lt.s32.totalorder %s70, 0
    %s74 = scalar_select %p73, %s70, 0
    %s75 = scalar_lea.vmem %s2, %s74
    %s76 = sadd.s32 0, 0
    %s77 = smul.u32 8, %s76
    %s78 = ssub.s32 1, %s77
    %s79 = smul.u32 16, %s78
    %s80 = sadd.s32 0, 0
    %s81 = smul.u32 8, %s80
    %s82 = ssub.s32 1, %s81
    %s83 = smul.u32 16, %s82
    %p84 = scmp.lt.s32.totalorder %s81, 0
    %s85 = scalar_select %p84, %s81, 0
    %s86 = scalar_lea.vmem %s1, %s85
    %s87 = sadd.s32 0, 0
    %s88 = smul.u32 8, %s87
    %s89 = ssub.s32 1, %s88
    %s90 = smul.u32 16, %s89
    %s91 = sadd.s32 0, 0
    %s92 = smul.u32 8, %s91
    %s93 = ssub.s32 1, %s92
    %s94 = smul.u32 16, %s93
    %p95 = scmp.lt.s32.totalorder %s92, 0
    %s96 = scalar_select %p95, %s92, 0
    %s97 = scalar_lea.vmem %s2, %s96
    %s98 = sadd.s32 0, 0
    %s99 = smul.u32 8, %s98
    %s100 = ssub.s32 1, %s99
    %s101 = smul.u32 16, %s100
    %s102 = sadd.s32 0, 0
    %s103 = smul.u32 %s102, 8
    %p104 = scmp.eq.s32.totalorder 0, 0
    // Predicated region
    $region18: #{tpu_custom_call.1} parent=1 // pred_check
      %p105 = pneg %p104
    $region19: #{tpu_custom_call.1} parent=1 // pred_check_branch
      %107 = sbr.rel (%p105) target = $region21
    $region20: #{tpu_custom_call.1} parent=1 // pred_region
      %108 = vst [vmem:[#allocation2] sm:$0xff] 0.0
      %109 = vst [vmem:[#allocation3] sm:$0xff] 0.0
      %110 = vst [vmem:[#allocation4] sm:$0xff] 0.0
    $region21: #{tpu_custom_call.1} parent=1 // pred_fallthru
      _
    %v111 = vld [vmem:[%s97] sm:$0xff]
    %v112 = vld [vmem:[#allocation5] sm:$0xff]
    %v113 = vld [vmem:[%s86] sm:$0xff]
    %v114 = vlaneseq
    %v115 = vand.u32 %v114, 127
    %v116 = vand.u32 %v115, 7
    %vm117 = vcmp.eq.s32.totalorder %v116, 0
    %v118 = vsub.f32 %v112, %v111
    %v119 = vmul.f32 %v118, %v118
    %v120 = vsub.f32 0.0, %v113
    %v121 = vmul.f32 %v120, 1.442695
    %v122 = vpow.pop %v121
    %v123 = vmul.f32 %v119, %v122
    %v124 = vadd.f32 %v123, %v113
    %s125 = sadd.s32 %s103, 8
    %p126 = scmp.le.s32.totalorder %s125, 1
    // Predicated region
    $region22: #{tpu_custom_call.1} parent=1 // pred_check
      %p127 = pneg %p126
    $region23: #{tpu_custom_call.1} parent=1 // pred_check_branch
      %129 = sbr.rel (%p127) target = $region25
    $region24: #{tpu_custom_call.1} parent=1 // pred_region
      %vm130 = vcmp.eq.f32.partialorder %v111, 1.0
      %v131 = vsel %vm117, 1, 0
      %vm132 = vcmp.eq.s32.totalorder %v131, 1
      %vm133 = vmand %vm132, %vm130
      %v134 = vsel %vm132, %v124, 0.0
      %v135 = vsel %vm133, 1.0, 0.0
      %136 = vrot.lane.b32.xlu0 %v135, 1
      %v137 = vpop.permute.xlu0 %136
      %v138 = vadd.f32 %v135, %v137
      %139 = vrot.lane.b32.xlu0 %v138, 2
      %v140 = vpop.permute.xlu0 %139
      %v141 = vadd.f32 %v138, %v140
      %142 = vrot.lane.b32.xlu0 %v141, 4
      %v143 = vpop.permute.xlu0 %142
      %v144 = vadd.f32 %v141, %v143
      %v145 = vsub.f32 %v144, %v135
      %v146 = vmul.f32 %v145, %v124
      %v147 = vld [vmem:[#allocation2] sm:$0xff]
      %v148 = vadd.f32 %v134, 0.0
      %v149 = vadd.f32 %v147, %v148
      %150 = vst [vmem:[#allocation2] sm:$0xff] %v149
      %v151 = vld [vmem:[#allocation3] sm:$0xff]
      %v152 = vadd.f32 %v146, 0.0
      %v153 = vadd.f32 %v151, %v152
      %154 = vst [vmem:[#allocation3] sm:$0xff] %v153
      %v155 = vld [vmem:[#allocation4] sm:$0xff]
      %v156 = vadd.f32 %v135, 0.0
      %v157 = vadd.f32 %v155, %v156
      %158 = vst [vmem:[#allocation4] sm:$0xff] %v157
    $region25: #{tpu_custom_call.1} parent=1 // pred_fallthru
      _
    %p159 = scmp.gt.s32.totalorder %s125, 1
    // Predicated region
    $region26: #{tpu_custom_call.1} parent=1 // pred_check
      %p160 = pneg %p159
    $region27: #{tpu_custom_call.1} parent=1 // pred_check_branch
      %162 = sbr.rel (%p160) target = $region29
    $region28: #{tpu_custom_call.1} parent=1 // pred_region
      %v163 = vlaneseq
      %v164 = vshrl.u32 %v163, 7
      %s165 = ssub.s32 1, %s103
      %v166 = vstv %s165
      %vm167 = vcmp.lt.s32.totalorder %v164, %v166
      %vm168 = vcmp.eq.f32.partialorder %v111, 1.0
      %v169 = vsel %vm117, 1, 0
      %vm170 = vcmp.eq.s32.totalorder %v169, 1
      %vm171 = vmand %vm170, %vm168
      %v172 = vsel %vm170, %v124, 0.0
      %v173 = vsel %vm167, 1, 0
      %vm174 = vcmp.eq.s32.totalorder %v173, 1
      %vm175 = vmand %vm171, %vm174
      %v176 = vsel %vm174, %v172, 0.0
      %v177 = vsel %vm175, 1.0, 0.0
      %178 = vrot.lane.b32.xlu0 %v177, 1
      %v179 = vpop.permute.xlu0 %178
      %v180 = vadd.f32 %v177, %v179
      %181 = vrot.lane.b32.xlu0 %v180, 2
      %v182 = vpop.permute.xlu0 %181
      %v183 = vadd.f32 %v180, %v182
      %184 = vrot.lane.b32.xlu0 %v183, 4
      %v185 = vpop.permute.xlu0 %184
      %v186 = vadd.f32 %v183, %v185
      %v187 = vsub.f32 %v186, %v177
      %v188 = vmul.f32 %v187, %v124
      %v189 = vsel %vm174, %v188, 0.0
      %v190 = vld [vmem:[#allocation2] sm:$0xff]
      %v191 = vadd.f32 %v176, 0.0
      %v192 = vadd.f32 %v190, %v191
      %193 = vst [vmem:[#allocation2] sm:$0xff] %v192
      %v194 = vld [vmem:[#allocation3] sm:$0xff]
      %v195 = vadd.f32 %v189, 0.0
      %v196 = vadd.f32 %v194, %v195
      %197 = vst [vmem:[#allocation3] sm:$0xff] %v196
      %v198 = vld [vmem:[#allocation4] sm:$0xff]
      %v199 = vadd.f32 %v177, 0.0
      %v200 = vadd.f32 %v198, %v199
      %201 = vst [vmem:[#allocation4] sm:$0xff] %v200
    $region29: #{tpu_custom_call.1} parent=1 // pred_fallthru
      _
    // Predicated region
    $region30: #{tpu_custom_call.1} parent=1 // pred_check
      %p202 = pneg %p104
    $region31: #{tpu_custom_call.1} parent=1 // pred_check_branch
      %204 = sbr.rel (%p202) target = $region33
    $region32: #{tpu_custom_call.1} parent=1 // pred_region
      %v205 = vld [vmem:[#allocation2] sm:$0xff]
      %206 = vadd.xlane.f32.xlu0 %v205
      %v207 = vpop.xlane.xlu0 %206
      %v208 = vrot.slane %v207, 4
      %v209 = vadd.f32 %v207, %v208
      %v210 = vrot.slane %v209, 2
      %v211 = vadd.f32 %v209, %v210
      %v212 = vrot.slane %v211, 1
      %v213 = vadd.f32 %v211, %v212
      %s214 = vtos %v213
      %v215 = vstv %s214
      %vm216 = vcmask 0
      %217 = vst.msk [vmem:[#allocation8] sm:$0x1] %vm216, %v215
      %v218 = vld [vmem:[#allocation3] sm:$0xff]
      %219 = vadd.xlane.f32.xlu0 %v218
      %v220 = vpop.xlane.xlu0 %219
      %v221 = vrot.slane %v220, 4
      %v222 = vadd.f32 %v220, %v221
      %v223 = vrot.slane %v222, 2
      %v224 = vadd.f32 %v222, %v223
      %v225 = vrot.slane %v224, 1
      %v226 = vadd.f32 %v224, %v225
      %s227 = vtos %v226
      %v228 = vstv %s227
      %229 = vst.msk [vmem:[#allocation9] sm:$0x1] %vm216, %v228
      %v230 = vld [vmem:[#allocation4] sm:$0xff]
      %231 = vadd.xlane.f32.xlu0 %v230
      %v232 = vpop.xlane.xlu0 %231
      %v233 = vrot.slane %v232, 4
      %v234 = vadd.f32 %v232, %v233
      %v235 = vrot.slane %v234, 2
      %v236 = vadd.f32 %v234, %v235
      %v237 = vrot.slane %v236, 1
      %v238 = vadd.f32 %v236, %v237
      %s239 = vtos %v238
      %v240 = vstv %s239
      %241 = vst.msk [vmem:[#allocation11] sm:$0x1] %vm216, %v240
    $region33: #{tpu_custom_call.1} parent=1 // pred_fallthru
      _
    // Predicated region
    $region34: #{tpu_custom_call.1} parent=1 // pred_check
      _
    $region35: #{tpu_custom_call.1} parent=1 // pred_check_branch
      %243 = sbr.rel (0) target = $region37
    $region36: #{tpu_custom_call.1} parent=1 // pred_region
      %s245 = ssub.s32 16, 16
      %246 = vsyncadd [#allocation7], %s245
      %s248 = sshll.u32 [#allocation8], 4
      %s249 = int_to_ptr.vmem [resolvable:$true] %s248
      %251 = dma.vmem_to_hbm [thread:$0]  %s249, 16, %s3, [#allocation7]
    $region37: #{tpu_custom_call.1} parent=1 // pred_fallthru
      _
    // Predicated region
    $region38: #{tpu_custom_call.1} parent=1 // pred_check
      _
    $region39: #{tpu_custom_call.1} parent=1 // pred_check_branch
      %253 = sbr.rel (0) target = $region41
    $region40: #{tpu_custom_call.1} parent=1 // pred_region
      %s255 = ssub.s32 16, 16
      %256 = vsyncadd [#allocation10], %s255
      %s258 = sshll.u32 [#allocation9], 4
      %s259 = int_to_ptr.vmem [resolvable:$true] %s258
      %261 = dma.vmem_to_hbm [thread:$0]  %s259, 16, %s4, [#allocation10]
    $region41: #{tpu_custom_call.1} parent=1 // pred_fallthru
      _
    // Predicated region
    $region42: #{tpu_custom_call.1} parent=1 // pred_check
      _
    $region43: #{tpu_custom_call.1} parent=1 // pred_check_branch
      %263 = sbr.rel (0) target = $region45
    $region44: #{tpu_custom_call.1} parent=1 // pred_region
      %s265 = ssub.s32 16, 16
      %266 = vsyncadd [#allocation10], %s265
      %s268 = sshll.u32 [#allocation11], 4
      %s269 = int_to_ptr.vmem [resolvable:$true] %s268
      %271 = dma.vmem_to_hbm [thread:$0]  %s269, 16, %s5, [#allocation10]
    $region45: #{tpu_custom_call.1} parent=1 // pred_fallthru
      _
    // Predicated region
    $region46: #{tpu_custom_call.1} parent=1 // pred_check
      _
    $region47: #{tpu_custom_call.1} parent=1 // pred_check_branch
      %273 = sbr.rel (0) target = $region49
    $region48: #{tpu_custom_call.1} parent=1 // pred_region
      %274 = dma.done [#allocation7], 16
    $region49: #{tpu_custom_call.1} parent=1 // pred_fallthru
      _
    // Predicated region
    $region50: #{tpu_custom_call.1} parent=1 // pred_check
      _
    $region51: #{tpu_custom_call.1} parent=1 // pred_check_branch
      %276 = sbr.rel (0) target = $region53
    $region52: #{tpu_custom_call.1} parent=1 // pred_region
      %277 = dma.done [#allocation10], 16
    $region53: #{tpu_custom_call.1} parent=1 // pred_fallthru
      _
    // Predicated region
    $region54: #{tpu_custom_call.1} parent=1 // pred_check
      _
    $region55: #{tpu_custom_call.1} parent=1 // pred_check_branch
      %279 = sbr.rel (0) target = $region57
    $region56: #{tpu_custom_call.1} parent=1 // pred_region
      %280 = dma.done [#allocation10], 16
    $region57: #{tpu_custom_call.1} parent=1 // pred_fallthru
      _
    %281 = vsyncpa [#allocation6], 1
    %282 = vsyncpa [#allocation7], 1
    %283 = vsyncpa [#allocation10], 1

</llo_original>
